<compile_context>
chip_gen: v7x
topology: tpu7x:2x2x1
jax: 0.10.0
libtpu: 0.0.40
codegen_flags: <defaults>
</compile_context>

<pallas_src>
import functools

import jax
import jax.numpy as jnp
from jax.experimental import pallas as pl
from jax.experimental.pallas import tpu as pltpu

SUBLANE = 8  # f32 sublane count


def _cdiv(a, b):
    return -(-a // b)


def _round_up(n, m):
    return _cdiv(n, m) * m


# ----------------------------------------------------------------------------
# Kernel: one (tb, S) row-tile -> fc1 + relu + fc2 + softmax -> (tb, A) tile.
# Weights / biases are VMEM-resident across the whole grid (index_map -> (0,0)).
# ----------------------------------------------------------------------------
def policy_kernel(x_ref, w1_ref, b1_ref, w2_ref, b2_ref, out_ref):
    # fc1 + relu
    h = jnp.dot(x_ref[...], w1_ref[...], preferred_element_type=jnp.float32)
    h = jnp.maximum(h + b1_ref[...], 0.0)

    # fc2
    logits = jnp.dot(h, w2_ref[...], preferred_element_type=jnp.float32)
    logits = logits + b2_ref[...]

    # numerically stable softmax over the action axis (exact division so each
    # row sums to 1 to fp32 accuracy -- matches F.softmax)
    m = jnp.max(logits, axis=-1, keepdims=True)
    e = jnp.exp(logits - m)
    denom = jnp.sum(e, axis=-1, keepdims=True)
    out_ref[...] = (e / denom).astype(out_ref.dtype)


# ----------------------------------------------------------------------------
# Parameter prep (once, outside the kernel): f32 cast, biases as (1, F) rows.
# Weights are stored (in_features, out_features).
# ----------------------------------------------------------------------------
def prepare_params(w1, b1, w2, b2):
    w1 = jnp.asarray(w1, jnp.float32)
    w2 = jnp.asarray(w2, jnp.float32)
    b1 = jnp.reshape(jnp.asarray(b1, jnp.float32), (1, -1))
    b2 = jnp.reshape(jnp.asarray(b2, jnp.float32), (1, -1))
    return w1, b1, w2, b2


def _pick_row_tile(batch, block_b):
    """Balanced row tile: padded tail < one tile; >=2 grid steps for v7x."""
    n_tiles = _cdiv(batch, block_b)
    if n_tiles == 1 and batch >= 32:
        n_tiles = 2  # give both v7x TensorCores work (no-op cost on v5e/v6e)
    tb = _round_up(_cdiv(batch, n_tiles), SUBLANE)
    grid = _cdiv(batch, tb)
    return tb, grid


# ----------------------------------------------------------------------------
# Wrapper: batch-tiled pallas_call.
# ----------------------------------------------------------------------------
@functools.partial(jax.jit, static_argnames=("block_b", "jax_fallback_batch"))
def policy_forward(x, w1, b1, w2, b2, *, block_b=2048, jax_fallback_batch=0):
    """x: (B, state_size); returns (B, action_size) action probabilities."""
    x = x.astype(jnp.float32)
    B, S = x.shape
    F1 = w1.shape[1]
    A = w2.shape[1]

    # For very small batches the pallas_call fixed cost dominates; allow a
    # plain-JAX path (disabled by default so the kernel is always exercised).
    if B <= jax_fallback_batch:
        h = jnp.maximum(x @ w1 + b1, 0.0)
        return jax.nn.softmax(h @ w2 + b2, axis=1)

    tb, grid = _pick_row_tile(B, block_b)
    Bp = grid * tb
    if Bp != B:
        x = jnp.pad(x, ((0, Bp - B), (0, 0)))  # padded rows sliced off below

    out = pl.pallas_call(
        policy_kernel,
        out_shape=jax.ShapeDtypeStruct((Bp, A), jnp.float32),
        grid=(grid,),
        in_specs=[
            pl.BlockSpec((tb, S), lambda i: (i, 0)),   # x: tiled over batch
            pl.BlockSpec((S, F1), lambda i: (0, 0)),   # W1: VMEM-resident
            pl.BlockSpec((1, F1), lambda i: (0, 0)),   # b1: VMEM-resident
            pl.BlockSpec((F1, A), lambda i: (0, 0)),   # W2: VMEM-resident
            pl.BlockSpec((1, A), lambda i: (0, 0)),    # b2: VMEM-resident
        ],
        # Lane-exact output block: only the real action columns hit HBM.
        out_specs=pl.BlockSpec((tb, A), lambda i: (i, 0)),
        compiler_params=pltpu.CompilerParams(
            dimension_semantics=("parallel",)),        # megacore on v7x
    )(x, w1, b1, w2, b2)

    if Bp != B:
        out = out[:B]  # drop padded rows only; no lane slice needed
    return out


# ----------------------------------------------------------------------------
# Deterministic init mimicking nn.Linear default (uniform +-1/sqrt(fan_in)),
# weights stored as (in_features, out_features).
# ----------------------------------------------------------------------------
def init_params(key, state_size, action_size, fc1_units=64):
    k1, k2, k3, k4 = jax.random.split(key, 4)
    bound1 = 1.0 / jnp.sqrt(state_size)
    bound2 = 1.0 / jnp.sqrt(fc1_units)
    w1 = jax.random.uniform(k1, (state_size, fc1_units), jnp.float32, -bound1, bound1)
    b1 = jax.random.uniform(k2, (fc1_units,), jnp.float32, -bound1, bound1)
    w2 = jax.random.uniform(k3, (fc1_units, action_size), jnp.float32, -bound2, bound2)
    b2 = jax.random.uniform(k4, (action_size,), jnp.float32, -bound2, bound2)
    return w1, b1, w2, b2


if __name__ == "__main__":
    # Shapes consistent with the module: state_size=8, action_size=4, fc1=64.
    state_size, action_size, fc1_units = 8, 4, 64

    key = jax.random.PRNGKey(0)
    kx_small, kx_large, kp = jax.random.split(key, 3)
    w1r, b1r, w2r, b2r = init_params(kp, state_size, action_size, fc1_units)
    w1, b1, w2, b2 = prepare_params(w1r, b1r, w2r, b2r)

    def reference(x):
        h = jnp.maximum(x @ w1 + b1, 0.0)
        return jax.nn.softmax(h @ w2 + b2, axis=1)

    # batch=2: tiny single-tile case; batch=300: multi-tile + row-padding case.
    for batch, kk in ((2, kx_small), (300, kx_large)):
        x = jax.random.normal(kk, (batch, state_size), dtype=jnp.float32)
        probs = jax.block_until_ready(policy_forward(x, w1, b1, w2, b2))
        probs_ref = reference(x)

        assert probs.shape == (batch, action_size)
        assert jnp.allclose(probs, probs_ref, atol=1e-4, rtol=1e-4), (
            batch, float(jnp.max(jnp.abs(probs - probs_ref))))
        # Exact division in the kernel -> rows sum to 1 to fp32 accuracy.
        assert jnp.allclose(jnp.sum(probs, axis=1), 1.0, atol=1e-5)

    # TODO(synk): Policy.act() (Categorical sampling / log_prob / host print)
    # is outside the forward pass and is not implemented as a kernel.
    print("KERNEL_OK")
</pallas_src>

<mosaic_0001>
module attributes {stable_mosaic.version = 11 : i64} {
  func.func @policy_kernel(%arg0: i32, %arg1: memref<8x8xf32, #tpu.memory_space<vmem>>, %arg2: memref<8x64xf32, #tpu.memory_space<vmem>>, %arg3: memref<1x64xf32, #tpu.memory_space<vmem>>, %arg4: memref<64x4xf32, #tpu.memory_space<vmem>>, %arg5: memref<1x4xf32, #tpu.memory_space<vmem>>, %arg6: memref<8x4xf32, #tpu.memory_space<vmem>>) attributes {dimension_semantics = [#tpu.dimension_semantics<parallel>], iteration_bounds = array<i64: 1>, scalar_prefetch = 0 : i64, scratch_operands = 0 : i64, tpu.core_type = #tpu.core_type<tc>, window_params = [{transform_indices = @transform_0, window_bounds = array<i64: 8, 8>}, {pipeline_mode = #tpu.pipeline_mode<synchronous>, transform_indices = @transform_1, window_bounds = array<i64: 8, 64>}, {pipeline_mode = #tpu.pipeline_mode<synchronous>, transform_indices = @transform_2, window_bounds = array<i64: 1, 64>}, {pipeline_mode = #tpu.pipeline_mode<synchronous>, transform_indices = @transform_3, window_bounds = array<i64: 64, 4>}, {pipeline_mode = #tpu.pipeline_mode<synchronous>, transform_indices = @transform_4, window_bounds = array<i64: 1, 4>}, {transform_indices = @transform_5, window_bounds = array<i64: 8, 4>}]} {
    %c0 = arith.constant 0 : index
    %c0_0 = arith.constant 0 : index
    %0 = vector.load %arg1[%c0, %c0_0] : memref<8x8xf32, #tpu.memory_space<vmem>>, vector<8x8xf32>
    %c0_1 = arith.constant 0 : index
    %c0_2 = arith.constant 0 : index
    %1 = vector.load %arg2[%c0_1, %c0_2] : memref<8x64xf32, #tpu.memory_space<vmem>>, vector<8x64xf32>
    %cst = arith.constant dense<0.000000e+00> : vector<8x64xf32>
    %2 = tpu.matmul %0, %1, %cst {dimension_numbers = #tpu.dot_dimension_numbers<[1], [0], [0], [1], [0, 0, 1, 1], [], []>} : vector<8x8xf32>, vector<8x64xf32>, vector<8x64xf32> -> vector<8x64xf32>
    %c0_3 = arith.constant 0 : index
    %c0_4 = arith.constant 0 : index
    %3 = vector.load %arg3[%c0_3, %c0_4] : memref<1x64xf32, #tpu.memory_space<vmem>>, vector<1x64xf32>
    %4 = vector.broadcast %3 : vector<1x64xf32> to vector<8x64xf32>
    %5 = arith.addf %2, %4 : vector<8x64xf32>
    %cst_5 = arith.constant 0.000000e+00 : f32
    %6 = vector.broadcast %cst_5 : f32 to vector<8x64xf32>
    %7 = arith.maximumf %5, %6 : vector<8x64xf32>
    %c0_6 = arith.constant 0 : index
    %c0_7 = arith.constant 0 : index
    %8 = vector.load %arg4[%c0_6, %c0_7] : memref<64x4xf32, #tpu.memory_space<vmem>>, vector<64x4xf32>
    %cst_8 = arith.constant dense<0.000000e+00> : vector<8x4xf32>
    %9 = tpu.matmul %7, %8, %cst_8 {dimension_numbers = #tpu.dot_dimension_numbers<[1], [0], [0], [1], [0, 0, 1, 1], [], []>} : vector<8x64xf32>, vector<64x4xf32>, vector<8x4xf32> -> vector<8x4xf32>
    %c0_9 = arith.constant 0 : index
    %c0_10 = arith.constant 0 : index
    %10 = vector.load %arg5[%c0_9, %c0_10] : memref<1x4xf32, #tpu.memory_space<vmem>>, vector<1x4xf32>
    %11 = vector.broadcast %10 : vector<1x4xf32> to vector<8x4xf32>
    %12 = arith.addf %9, %11 : vector<8x4xf32>
    %cst_11 = arith.constant dense<0xFF800000> : vector<8xf32>
    %13 = vector.multi_reduction <maximumf>, %12, %cst_11 [1] : vector<8x4xf32> to vector<8xf32>
    %14 = vector.shape_cast %13 : vector<8xf32> to vector<8x1xf32>
    %15 = vector.broadcast %14 : vector<8x1xf32> to vector<8x4xf32>
    %16 = arith.subf %12, %15 : vector<8x4xf32>
    %17 = math.exp %16 : vector<8x4xf32>
    %cst_12 = arith.constant dense<0.000000e+00> : vector<8xf32>
    %18 = vector.multi_reduction <add>, %17, %cst_12 [1] : vector<8x4xf32> to vector<8xf32>
    %19 = vector.shape_cast %18 : vector<8xf32> to vector<8x1xf32>
    %20 = vector.broadcast %19 : vector<8x1xf32> to vector<8x4xf32>
    %21 = arith.divf %17, %20 : vector<8x4xf32>
    %c0_13 = arith.constant 0 : index
    %c0_14 = arith.constant 0 : index
    %22 = vector.load %arg6[%c0_13, %c0_14] : memref<8x4xf32, #tpu.memory_space<vmem>>, vector<8x4xf32>
    tpu.vector_store %arg6[%c0_13, %c0_14], %21 {strides = array<i32>} : memref<8x4xf32, #tpu.memory_space<vmem>>, vector<8x4xf32>,
    return
  }
  func.func @transform_0(%arg0: i32) -> (i32, i32) {
    %c0_i32 = arith.constant 0 : i32
    %c0_i32_0 = arith.constant 0 : i32
    return %arg0, %c0_i32 : i32, i32
  }
  func.func @transform_1(%arg0: i32) -> (i32, i32) {
    %c0_i32 = arith.constant 0 : i32
    %c0_i32_0 = arith.constant 0 : i32
    %c0_i32_1 = arith.constant 0 : i32
    return %c0_i32, %c0_i32_0 : i32, i32
  }
  func.func @transform_2(%arg0: i32) -> (i32, i32) {
    %c0_i32 = arith.constant 0 : i32
    %c0_i32_0 = arith.constant 0 : i32
    %c0_i32_1 = arith.constant 0 : i32
    return %c0_i32, %c0_i32_0 : i32, i32
  }
  func.func @transform_3(%arg0: i32) -> (i32, i32) {
    %c0_i32 = arith.constant 0 : i32
    %c0_i32_0 = arith.constant 0 : i32
    %c0_i32_1 = arith.constant 0 : i32
    return %c0_i32, %c0_i32_0 : i32, i32
  }
  func.func @transform_4(%arg0: i32) -> (i32, i32) {
    %c0_i32 = arith.constant 0 : i32
    %c0_i32_0 = arith.constant 0 : i32
    %c0_i32_1 = arith.constant 0 : i32
    return %c0_i32, %c0_i32_0 : i32, i32
  }
  func.func @transform_5(%arg0: i32) -> (i32, i32) {
    %c0_i32 = arith.constant 0 : i32
    %c0_i32_0 = arith.constant 0 : i32
    return %arg0, %c0_i32 : i32, i32
  }
}

</mosaic_0001>

<llo_original>
// kernel: policy_forward.1
$region0: #{policy_forward.1}
  #allocation0 [shape = 'u32[]', space=smem, size = 0x4, offset = 0x4, fixed_abs, tag = 'smem constant byte address 0x4 - core index']
  #allocation1 [shape = 'u32[144,128]{1,0:T(1,128)}', space=vmem, size = 0x12000, scoped, tag = 'internal scratch']
  %s0 = inlined_call_operand.vmem [shape: f32[8,8], index: 0, kind: input, shape index: {}]
  %s1 = inlined_call_operand.vmem [shape: f32[8,64], index: 1, kind: input, shape index: {}]
  %s2 = inlined_call_operand.vmem [shape: f32[1,64], index: 2, kind: input, shape index: {}]
  %s3 = inlined_call_operand.vmem [shape: f32[64,4], index: 3, kind: input, shape index: {}]
  %s4 = inlined_call_operand.vmem [shape: f32[1,4], index: 4, kind: input, shape index: {}]
  %s5 = inlined_call_operand.vmem [shape: f32[8,4], index: 5, kind: output, shape index: {}]
  %s6 = sld [smem:[#allocation0]]
  $region30: #{policy_forward.1} parent=0
    _
  %s8 = ssub.s32 1, %s6
  %s9 = scalar_select 0, %s8, %s6
  // Predicated region
  $region2: #{policy_forward.1} parent=0 // pred_check
    _
  $region3: #{policy_forward.1} parent=0 // pred_check_branch
    %11 = sbr.rel (0) target = $region5
  $region4: #{policy_forward.1} parent=0 // pred_region
    _
  $region5: #{policy_forward.1} parent=0 // pred_fallthru
    _
  // Predicated region
  $region6: #{policy_forward.1} parent=0 // pred_check
    _
  $region7: #{policy_forward.1} parent=0 // pred_check_branch
    %13 = sbr.rel (0) target = $region9
  $region8: #{policy_forward.1} parent=0 // pred_region
    _
  $region9: #{policy_forward.1} parent=0 // pred_fallthru
    _
  // Predicated region
  $region10: #{policy_forward.1} parent=0 // pred_check
    _
  $region11: #{policy_forward.1} parent=0 // pred_check_branch
    %15 = sbr.rel (0) target = $region13
  $region12: #{policy_forward.1} parent=0 // pred_region
    _
  $region13: #{policy_forward.1} parent=0 // pred_fallthru
    _
  // Predicated region
  $region14: #{policy_forward.1} parent=0 // pred_check
    _
  $region15: #{policy_forward.1} parent=0 // pred_check_branch
    %17 = sbr.rel (0) target = $region17
  $region16: #{policy_forward.1} parent=0 // pred_region
    _
  $region17: #{policy_forward.1} parent=0 // pred_fallthru
    _
  // Predicated region
  $region18: #{policy_forward.1} parent=0 // pred_check
    _
  $region19: #{policy_forward.1} parent=0 // pred_check_branch
    %19 = sbr.rel (0) target = $region21
  $region20: #{policy_forward.1} parent=0 // pred_region
    _
  $region21: #{policy_forward.1} parent=0 // pred_fallthru
    _
  %v20 = vld [vmem:[%s0] sm:$0xff]
  %v21 = vld [vmem:[%s1] sm:$0xff]
  %v22 = vld [vmem:[%s2] sm:$0x1]
  %v24 = vlaneseq
  %v25 = vshrl.u32 %v24, 7
  %v26 = vsub.s32 0, %v25
  %v27 = vrot.slane %v22, %v26
  %vm29 = vcmask 64512
  %v31 = vsel %vm29, %v20, 0
  %33 = vmatprep.subr.mxu0 0.0
  %34 = vmatpush1.msra.mxu0 %v21
  %35 = vmatprep.subr.mxu0 0.0
  %36 = vmatpush1.msra.mxu0 0.0
  %37 = vmatprep.subr.mxu0 0.0
  %38 = vmatpush1.msra.mxu0 0.0
  %39 = vmatprep.subr.mxu0 0.0
  %40 = vmatpush1.msra.mxu0 0.0
  %41 = vmatprep.subr.mxu0 0.0
  %42 = vmatpush1.msra.mxu0 0.0
  %43 = vmatprep.subr.mxu0 0.0
  %44 = vmatpush1.msra.mxu0 0.0
  %45 = vmatprep.subr.mxu0 0.0
  %46 = vmatpush1.msra.mxu0 0.0
  %47 = vmatprep.subr.mxu0 0.0
  %48 = vmatpush1.msra.mxu0 0.0
  %49 = vmatprep.subr.mxu0 0.0
  %50 = vmatpush1.msra.mxu0 0.0
  %51 = vmatprep.subr.mxu0 0.0
  %52 = vmatpush1.msra.mxu0 0.0
  %53 = vmatprep.subr.mxu0 0.0
  %54 = vmatpush1.msra.mxu0 0.0
  %55 = vmatprep.subr.mxu0 0.0
  %56 = vmatpush1.msra.mxu0 0.0
  %57 = vmatprep.subr.mxu0 0.0
  %58 = vmatpush1.msra.mxu0 0.0
  %59 = vmatprep.subr.mxu0 0.0
  %60 = vmatpush1.msra.mxu0 0.0
  %61 = vmatprep.subr.mxu0 0.0
  %62 = vmatpush1.msra.mxu0 0.0
  %63 = vmatprep.subr.mxu0 0.0
  %64 = vmatpush1.msra.mxu0 0.0
  %65 = vmatprep.subr.mxu0 0.0
  %66 = vmatpush1.msra.mxu0 0.0
  %67 = vmatprep.subr.mxu0 0.0
  %68 = vmatpush1.msra.mxu0 0.0
  %69 = vmatprep.subr.mxu0 0.0
  %70 = vmatpush1.msra.mxu0 0.0
  %71 = vmatprep.subr.mxu0 0.0
  %72 = vmatpush1.msra.mxu0 0.0
  %73 = vmatprep.subr.mxu0 0.0
  %74 = vmatpush1.msra.mxu0 0.0
  %75 = vmatprep.subr.mxu0 0.0
  %76 = vmatpush1.msra.mxu0 0.0
  %77 = vmatprep.subr.mxu0 0.0
  %78 = vmatpush1.msra.mxu0 0.0
  %79 = vmatprep.subr.mxu0 0.0
  %80 = vmatpush1.msra.mxu0 0.0
  %81 = vmatprep.subr.mxu0 0.0
  %82 = vmatpush1.msra.mxu0 0.0
  %83 = vmatprep.subr.mxu0 0.0
  %84 = vmatpush1.msra.mxu0 0.0
  %85 = vmatprep.subr.mxu0 0.0
  %86 = vmatpush1.msra.mxu0 0.0
  %87 = vmatprep.subr.mxu0 0.0
  %88 = vmatpush1.msra.mxu0 0.0
  %89 = vmatprep.subr.mxu0 0.0
  %90 = vmatpush1.msra.mxu0 0.0
  %91 = vmatprep.subr.mxu0 0.0
  %92 = vmatpush1.msra.mxu0 0.0
  %93 = vmatprep.subr.mxu0 0.0
  %94 = vmatpush1.msra.mxu0 0.0
  %95 = vmatprep.subr.mxu0 0.0
  %96 = vmatpush1.msra.mxu0 0.0
  %97 = vmatprep.mubr.f32.mxu0 0.0
  %98 = vmatmul.mubr.f32.gmra.mrb[0].mxu0 %v31
  %v99 = vpop.f32.mrb[0].mxu0
  %v100 = vadd.f32 %v27, %v99
  %v101 = vpop.f32.mrb[0].mxu0
  %102 = vdwg.mxu0
  %v103 = vmax.f32 %v100, 0.0
  %v104 = vld [vmem:[%s3] sm:$0xff]
  %v105 = vld [vmem:[%s3 + $0x8] sm:$0xff]
  %v106 = vld [vmem:[%s3 + $0x10] sm:$0xff]
  %v107 = vld [vmem:[%s3 + $0x18] sm:$0xff]
  %v108 = vld [vmem:[%s3 + $0x20] sm:$0xff]
  %v109 = vld [vmem:[%s3 + $0x28] sm:$0xff]
  %v110 = vld [vmem:[%s3 + $0x30] sm:$0xff]
  %v111 = vld [vmem:[%s3 + $0x38] sm:$0xff]
  %v112 = vld [vmem:[%s4] sm:$0x1]
  %v114 = vlaneseq
  %v115 = vshrl.u32 %v114, 7
  %v116 = vsub.s32 0, %v115
  %v117 = vrot.slane %v112, %v116
  %vm119 = vcmask 523264
  %v121 = vsel %vm119, %v103, 0
  %123 = vmatprep.subr.mxu0 0.0
  %124 = vmatpush1.msra.mxu0 %v104
  %125 = vmatprep.subr.mxu0 0.0
  %126 = vmatpush1.msra.mxu0 %v105
  %127 = vmatprep.subr.mxu0 0.0
  %128 = vmatpush1.msra.mxu0 %v106
  %129 = vmatprep.subr.mxu0 0.0
  %130 = vmatpush1.msra.mxu0 %v107
  %131 = vmatprep.subr.mxu0 0.0
  %132 = vmatpush1.msra.mxu0 %v108
  %133 = vmatprep.subr.mxu0 0.0
  %134 = vmatpush1.msra.mxu0 %v109
  %135 = vmatprep.subr.mxu0 0.0
  %136 = vmatpush1.msra.mxu0 %v110
  %137 = vmatprep.subr.mxu0 0.0
  %138 = vmatpush1.msra.mxu0 %v111
  %139 = vmatprep.subr.mxu0 0.0
  %140 = vmatpush1.msra.mxu0 0.0
  %141 = vmatprep.subr.mxu0 0.0
  %142 = vmatpush1.msra.mxu0 0.0
  %143 = vmatprep.subr.mxu0 0.0
  %144 = vmatpush1.msra.mxu0 0.0
  %145 = vmatprep.subr.mxu0 0.0
  %146 = vmatpush1.msra.mxu0 0.0
  %147 = vmatprep.subr.mxu0 0.0
  %148 = vmatpush1.msra.mxu0 0.0
  %149 = vmatprep.subr.mxu0 0.0
  %150 = vmatpush1.msra.mxu0 0.0
  %151 = vmatprep.subr.mxu0 0.0
  %152 = vmatpush1.msra.mxu0 0.0
  %153 = vmatprep.subr.mxu0 0.0
  %154 = vmatpush1.msra.mxu0 0.0
  %155 = vmatprep.subr.mxu0 0.0
  %156 = vmatpush1.msra.mxu0 0.0
  %157 = vmatprep.subr.mxu0 0.0
  %158 = vmatpush1.msra.mxu0 0.0
  %159 = vmatprep.subr.mxu0 0.0
  %160 = vmatpush1.msra.mxu0 0.0
  %161 = vmatprep.subr.mxu0 0.0
  %162 = vmatpush1.msra.mxu0 0.0
  %163 = vmatprep.subr.mxu0 0.0
  %164 = vmatpush1.msra.mxu0 0.0
  %165 = vmatprep.subr.mxu0 0.0
  %166 = vmatpush1.msra.mxu0 0.0
  %167 = vmatprep.subr.mxu0 0.0
  %168 = vmatpush1.msra.mxu0 0.0
  %169 = vmatprep.subr.mxu0 0.0
  %170 = vmatpush1.msra.mxu0 0.0
  %171 = vmatprep.subr.mxu0 0.0
  %172 = vmatpush1.msra.mxu0 0.0
  %173 = vmatprep.subr.mxu0 0.0
  %174 = vmatpush1.msra.mxu0 0.0
  %175 = vmatprep.subr.mxu0 0.0
  %176 = vmatpush1.msra.mxu0 0.0
  %177 = vmatprep.subr.mxu0 0.0
  %178 = vmatpush1.msra.mxu0 0.0
  %179 = vmatprep.subr.mxu0 0.0
  %180 = vmatpush1.msra.mxu0 0.0
  %181 = vmatprep.subr.mxu0 0.0
  %182 = vmatpush1.msra.mxu0 0.0
  %183 = vmatprep.subr.mxu0 0.0
  %184 = vmatpush1.msra.mxu0 0.0
  %185 = vmatprep.subr.mxu0 0.0
  %186 = vmatpush1.msra.mxu0 0.0
  %187 = vmatprep.mubr.f32.mxu0 0.0
  %188 = vmatmul.mubr.f32.gmra.mrb[0].mxu0 %v121
  %v189 = vpop.f32.mrb[0].mxu0
  %v190 = vadd.f32 %v117, %v189
  %v191 = vpop.f32.mrb[0].mxu0
  %192 = vdwg.mxu0
  %vm193 = vcmask 31744
  %v194 = vsel %vm193, %v190, -inf
  %195 = vmax.xlane.f32.xlu0 %v194
  %v196 = vpop.xlane.xlu0 %195
  %v197 = vsub.f32 %v190, %v196
  %v198 = vmul.f32 %v197, 1.442695
  %v199 = vpow.pop %v198
  %v200 = vsel %vm193, %v199, 0.0
  %201 = vadd.xlane.f32.xlu0 %v200
  %v202 = vpop.xlane.xlu0 %201
  %v203 = vrcp.pop %v202
  %v204 = vmul.f32 %v199, %v203
  %205 = vst.msk [vmem:[%s5] sm:$0xff] %vm193, %v204
  // Predicated region
  $region22: #{policy_forward.1} parent=0 // pred_check
    _
  $region23: #{policy_forward.1} parent=0 // pred_check_branch
    %207 = sbr.rel (0) target = $region25
  $region24: #{policy_forward.1} parent=0 // pred_region
    _
  $region25: #{policy_forward.1} parent=0 // pred_fallthru
    _
  // Predicated region
  $region26: #{policy_forward.1} parent=0 // pred_check
    _
  $region27: #{policy_forward.1} parent=0 // pred_check_branch
    %209 = sbr.rel (0) target = $region29
  $region28: #{policy_forward.1} parent=0 // pred_region
    _
  $region29: #{policy_forward.1} parent=0 // pred_fallthru
    _

</llo_original>
